<compile_context>
chip_gen: v7x
topology: tpu7x:2x2x1
jax: 0.10.0
libtpu: 0.0.40
codegen_flags: <defaults>
</compile_context>

<pallas_src>
import numpy as np
import jax
import jax.numpy as jnp
from jax.experimental import pallas as pl
from jax.experimental.pallas import tpu as pltpu


# ----------------------------------------------------------------------------
# Host-side glue: per-axis bicubic interpolation matrices (matches PyTorch
# upsample_bicubic2d, align_corners=False, cubic A = -0.75).
# ----------------------------------------------------------------------------
def _cubic_coeffs(t, A=-0.75):
    def conv1(x):  # |x| <= 1
        return ((A + 2.0) * x - (A + 3.0)) * x * x + 1.0

    def conv2(x):  # 1 < |x| < 2
        return ((A * x - 5.0 * A) * x + 8.0 * A) * x - 4.0 * A

    return np.stack([conv2(t + 1.0), conv1(t), conv1(1.0 - t), conv2(2.0 - t)],
                    axis=-1)


def _bicubic_matrix(out_size: int, in_size: int) -> np.ndarray:
    """M (out_size, in_size) s.t. y = M @ x reproduces F.interpolate bicubic."""
    if out_size == in_size:
        return np.eye(out_size, dtype=np.float32)
    scale = in_size / out_size
    i = np.arange(out_size, dtype=np.float64)
    real = scale * (i + 0.5) - 0.5
    idx0 = np.floor(real).astype(np.int64)
    t = real - idx0
    coeffs = _cubic_coeffs(t)                      # (out, 4)
    M = np.zeros((out_size, in_size), dtype=np.float64)
    rows = np.arange(out_size)
    for k in range(4):
        idx = np.clip(idx0 - 1 + k, 0, in_size - 1)   # border replicate clamp
        np.add.at(M, (rows, idx), coeffs[:, k])
    return M.astype(np.float32)


# ----------------------------------------------------------------------------
# Precompute: interpolated pos-emb table (T, D) via separable matmuls.
# (Tiny compute; done once per call, outside the streaming Pallas kernel.)
# ----------------------------------------------------------------------------
def _interp_pos_table(weight, grid_hws):
    H, W, D = weight.shape
    w32 = weight.astype(jnp.float32)
    cache = {}
    pos_list = []
    for (h, w) in grid_hws:
        h, w = int(h), int(w)
        key = (h, w)
        if key not in cache:
            if (h, w) == (H, W):
                cache[key] = w32.reshape(H * W, D)
            else:
                A = jnp.asarray(_bicubic_matrix(h, H))       # (h, H)
                B = jnp.asarray(_bicubic_matrix(w, W))       # (w, W)
                tmp = jnp.einsum("ph,hwd->pwd", A, w32)      # (h, W, D)
                pos = jnp.einsum("qw,pwd->pqd", B, tmp)      # (h, w, D)
                cache[key] = pos.reshape(h * w, D)
        pos_list.append(cache[key])
    return jnp.concatenate(pos_list, axis=0)                 # (T, D) f32


# ----------------------------------------------------------------------------
# Pallas kernel: fused, lane-dense streaming add  out = x + pos.
# ----------------------------------------------------------------------------
def _fused_add_kernel(x_ref, p_ref, o_ref):
    o_ref[...] = (x_ref[...].astype(jnp.float32) + p_ref[...]).astype(o_ref.dtype)


def _round_up(a: int, b: int) -> int:
    return (a + b - 1) // b * b


def _fused_add(x_flat, pos_flat, *, lane=512, blk_rows=512):
    """Elementwise x_flat + pos_flat via a tiled, lane-dense Pallas add."""
    n = x_flat.shape[0]
    rows_needed = pl.cdiv(n, lane)
    # Row tile: multiple of 8 sublanes, clamped for tiny inputs.
    blk = max(8, min(blk_rows, _round_up(rows_needed, 8)))
    rows = _round_up(rows_needed, blk)
    n_pad = rows * lane

    xp = jnp.pad(x_flat, (0, n_pad - n)).reshape(rows, lane)
    pp = jnp.pad(pos_flat, (0, n_pad - n)).reshape(rows, lane)

    bytes_accessed = int(
        n_pad * xp.dtype.itemsize      # x read
        + n_pad * pp.dtype.itemsize    # pos read
        + n_pad * xp.dtype.itemsize    # out write
    )

    out = pl.pallas_call(
        _fused_add_kernel,
        out_shape=jax.ShapeDtypeStruct((rows, lane), x_flat.dtype),
        grid_spec=pltpu.PrefetchScalarGridSpec(
            num_scalar_prefetch=0,
            grid=(rows // blk,),
            in_specs=[
                pl.BlockSpec((blk, lane), lambda i: (i, 0)),   # x slab tile
                pl.BlockSpec((blk, lane), lambda i: (i, 0)),   # pos slab tile
            ],
            out_specs=pl.BlockSpec((blk, lane), lambda i: (i, 0)),
        ),
        compiler_params=pltpu.CompilerParams(
            dimension_semantics=("parallel",)),   # v7x: 2 TCs split row tiles
        cost_estimate=pl.CostEstimate(
            flops=n_pad, transcendentals=0, bytes_accessed=bytes_accessed),
    )(xp, pp)
    return out.reshape(-1)[:n]


# ----------------------------------------------------------------------------
# Public wrapper: the module's forward pass.
# ----------------------------------------------------------------------------
def learnable_2d_interp_pos_emb(x, weight, grid_hws, *, lane=512, blk_rows=512):
    """x: (T, D); weight: (H, W, D); grid_hws: host list of (h, w) per image."""
    T, D = x.shape
    pos = _interp_pos_table(weight, grid_hws)          # (T, D) f32
    assert pos.shape[0] == T, "x token count must match sum(h*w for grid_hws)"
    out_flat = _fused_add(x.reshape(-1), pos.reshape(-1),
                          lane=lane, blk_rows=blk_rows)
    return out_flat.reshape(T, D)


if __name__ == "__main__":
    # Module config: height=4, width=4, dim=32
    H, W, D = 4, 4, 32
    # Two "images": first matches (H, W) exactly (no interp path),
    # second requires bicubic interpolation to (6, 8).
    grid_hws = [(4, 4), (6, 8)]
    T = sum(h * w for h, w in grid_hws)  # 16 + 48 = 64 tokens

    key = jax.random.PRNGKey(0)
    kx, kw = jax.random.split(key)
    x = jax.random.normal(kx, (T, D), dtype=jnp.float32)
    # nn.Parameter(torch.empty(H, W, dim)) + nn.init.normal_ -> standard normal
    weight = jax.random.normal(kw, (H, W, D), dtype=jnp.float32)

    out = learnable_2d_interp_pos_emb(x, weight, grid_hws)
    jax.block_until_ready(out)
    assert out.shape == (T, D)

    # --- correctness check vs. a pure-JAX/NumPy reference -------------------
    # Reference pos table via the dense Kronecker formulation (previously
    # validated against PyTorch F.interpolate bicubic).
    w_np = np.asarray(weight, dtype=np.float32).reshape(H * W, D)
    ref_pos = []
    for (h, w) in grid_hws:
        Kd = np.kron(_bicubic_matrix(int(h), H), _bicubic_matrix(int(w), W))
        ref_pos.append(Kd.astype(np.float32) @ w_np)
    ref = np.asarray(x, dtype=np.float32) + np.concatenate(ref_pos, axis=0)
    np.testing.assert_allclose(np.asarray(out), ref, rtol=1e-5, atol=1e-4)

    print("KERNEL_OK")
</pallas_src>

<mosaic_0001>
module attributes {stable_mosaic.version = 11 : i64} {
  func.func @_fused_add_kernel(%arg0: i32, %arg1: memref<8x512xf32, #tpu.memory_space<vmem>>, %arg2: memref<8x512xf32, #tpu.memory_space<vmem>>, %arg3: memref<8x512xf32, #tpu.memory_space<vmem>>) attributes {dimension_semantics = [#tpu.dimension_semantics<parallel>], iteration_bounds = array<i64: 1>, scalar_prefetch = 0 : i64, scratch_operands = 0 : i64, tpu.core_type = #tpu.core_type<tc>, window_params = [{transform_indices = @transform_0, window_bounds = array<i64: 8, 512>}, {transform_indices = @transform_1, window_bounds = array<i64: 8, 512>}, {transform_indices = @transform_2, window_bounds = array<i64: 8, 512>}]} {
    %c0 = arith.constant 0 : index
    %c0_0 = arith.constant 0 : index
    %0 = vector.load %arg1[%c0, %c0_0] : memref<8x512xf32, #tpu.memory_space<vmem>>, vector<8x512xf32>
    %c0_1 = arith.constant 0 : index
    %c0_2 = arith.constant 0 : index
    %1 = vector.load %arg2[%c0_1, %c0_2] : memref<8x512xf32, #tpu.memory_space<vmem>>, vector<8x512xf32>
    %2 = arith.addf %0, %1 : vector<8x512xf32>
    %c0_3 = arith.constant 0 : index
    %c0_4 = arith.constant 0 : index
    %3 = vector.load %arg3[%c0_3, %c0_4] : memref<8x512xf32, #tpu.memory_space<vmem>>, vector<8x512xf32>
    tpu.vector_store %arg3[%c0_3, %c0_4], %2 {strides = array<i32>} : memref<8x512xf32, #tpu.memory_space<vmem>>, vector<8x512xf32>,
    return
  }
  func.func @transform_0(%arg0: i32) -> (i32, i32) {
    %c0_i32 = arith.constant 0 : i32
    %c0_i32_0 = arith.constant 0 : i32
    return %arg0, %c0_i32 : i32, i32
  }
  func.func @transform_1(%arg0: i32) -> (i32, i32) {
    %c0_i32 = arith.constant 0 : i32
    %c0_i32_0 = arith.constant 0 : i32
    return %arg0, %c0_i32 : i32, i32
  }
  func.func @transform_2(%arg0: i32) -> (i32, i32) {
    %c0_i32 = arith.constant 0 : i32
    %c0_i32_0 = arith.constant 0 : i32
    return %arg0, %c0_i32 : i32, i32
  }
}

</mosaic_0001>

<llo_original>
// kernel: tpu_custom_call.1
$region0: #{tpu_custom_call.1}
  #allocation0 [shape = 'u32[]', space=smem, size = 0x4, offset = 0x4, fixed_abs, tag = 'smem constant byte address 0x4 - core index']
  #allocation1 [shape = 'u32[144,128]{1,0:T(1,128)}', space=vmem, size = 0x12000, scoped, tag = 'internal scratch']
  %s0 = inlined_call_operand.hbm [shape: f32[8,512], index: 0, kind: input, shape index: {}]
  %s1 = inlined_call_operand.hbm [shape: f32[8,512], index: 1, kind: input, shape index: {}]
  %s2 = inlined_call_operand.hbm [shape: f32[8,512], index: 2, kind: output, shape index: {}]
  %s3 = sld [smem:[#allocation0]]
  $region26: #{tpu_custom_call.1} parent=0
    _
  %s5 = ssub.s32 1, %s3
  %s6 = scalar_select 0, %s5, %s3
  $region1: #{tpu_custom_call.1} parent=0
    #allocation2 [shape = 'u8[16384]{0}', space=vmem, size = 0x4000, scoped, tag = 'input window, operand 0, single buffered']
    #allocation3 [shape = 's32[1]{0}', space=sflag, size = 0x4, scoped, tag = 'scoped memory for tpu_custom_call.1']
    #allocation4 [shape = 's32[1]{0}', space=sflag, size = 0x4, scoped, tag = 'scoped memory for tpu_custom_call.1']
    #allocation5 [shape = 'u8[16384]{0}', space=vmem, size = 0x4000, scoped, tag = 'input window, operand 1, single buffered']
    #allocation6 [shape = 's32[1]{0}', space=sflag, size = 0x4, scoped, tag = 'scoped memory for tpu_custom_call.1']
    #allocation7 [shape = 'u8[16384]{0}', space=vmem, size = 0x4000, scoped, tag = 'output window, operand 0, single buffered']
    %7 = vsyncpa [#allocation3], 0
    %8 = vsyncpa [#allocation6], 0
    %9 = vsyncpa [#allocation4], 0
    // Predicated region
    $region2: #{tpu_custom_call.1} parent=1 // pred_check
      _
    $region3: #{tpu_custom_call.1} parent=1 // pred_check_branch
      %11 = sbr.rel (0) target = $region5
    $region4: #{tpu_custom_call.1} parent=1 // pred_region
      %s13 = ssub.s32 512, 512
      %14 = vsyncadd [#allocation3], %s13
      %s16 = sshll.u32 [#allocation2], 4
      %s17 = int_to_ptr.vmem [resolvable:$true] %s16
      %19 = dma.hbm_to_vmem [thread:$0]  %s0, 512, %s17, [#allocation3]
    $region5: #{tpu_custom_call.1} parent=1 // pred_fallthru
      _
    // Predicated region
    $region6: #{tpu_custom_call.1} parent=1 // pred_check
      _
    $region7: #{tpu_custom_call.1} parent=1 // pred_check_branch
      %21 = sbr.rel (0) target = $region9
    $region8: #{tpu_custom_call.1} parent=1 // pred_region
      %s23 = ssub.s32 512, 512
      %24 = vsyncadd [#allocation6], %s23
      %s26 = sshll.u32 [#allocation5], 4
      %s27 = int_to_ptr.vmem [resolvable:$true] %s26
      %29 = dma.hbm_to_vmem [thread:$0]  %s1, 512, %s27, [#allocation6]
    $region9: #{tpu_custom_call.1} parent=1 // pred_fallthru
      _
    // Predicated region
    $region10: #{tpu_custom_call.1} parent=1 // pred_check
      _
    $region11: #{tpu_custom_call.1} parent=1 // pred_check_branch
      %31 = sbr.rel (0) target = $region13
    $region12: #{tpu_custom_call.1} parent=1 // pred_region
      %32 = dma.done [#allocation3], 512
    $region13: #{tpu_custom_call.1} parent=1 // pred_fallthru
      _
    // Predicated region
    $region14: #{tpu_custom_call.1} parent=1 // pred_check
      _
    $region15: #{tpu_custom_call.1} parent=1 // pred_check_branch
      %34 = sbr.rel (0) target = $region17
    $region16: #{tpu_custom_call.1} parent=1 // pred_region
      %35 = dma.done [#allocation6], 512
    $region17: #{tpu_custom_call.1} parent=1 // pred_fallthru
      _
    %v36 = vld [vmem:[#allocation2] sm:$0xff]
    %v37 = vld [vmem:[#allocation2 + $0x8] sm:$0xff]
    %v38 = vld [vmem:[#allocation2 + $0x10] sm:$0xff]
    %v39 = vld [vmem:[#allocation2 + $0x18] sm:$0xff]
    %v40 = vld [vmem:[#allocation5] sm:$0xff]
    %v41 = vld [vmem:[#allocation5 + $0x8] sm:$0xff]
    %v42 = vld [vmem:[#allocation5 + $0x10] sm:$0xff]
    %v43 = vld [vmem:[#allocation5 + $0x18] sm:$0xff]
    %v44 = vadd.f32 %v36, %v40
    %v45 = vadd.f32 %v37, %v41
    %v46 = vadd.f32 %v38, %v42
    %v47 = vadd.f32 %v39, %v43
    %48 = vst [vmem:[#allocation7] sm:$0xff] %v44
    %49 = vst [vmem:[#allocation7 + $0x8] sm:$0xff] %v45
    %50 = vst [vmem:[#allocation7 + $0x10] sm:$0xff] %v46
    %51 = vst [vmem:[#allocation7 + $0x18] sm:$0xff] %v47
    // Predicated region
    $region18: #{tpu_custom_call.1} parent=1 // pred_check
      _
    $region19: #{tpu_custom_call.1} parent=1 // pred_check_branch
      %53 = sbr.rel (0) target = $region21
    $region20: #{tpu_custom_call.1} parent=1 // pred_region
      %s55 = ssub.s32 512, 512
      %56 = vsyncadd [#allocation4], %s55
      %s58 = sshll.u32 [#allocation7], 4
      %s59 = int_to_ptr.vmem [resolvable:$true] %s58
      %61 = dma.vmem_to_hbm [thread:$0]  %s59, 512, %s2, [#allocation4]
    $region21: #{tpu_custom_call.1} parent=1 // pred_fallthru
      _
    // Predicated region
    $region22: #{tpu_custom_call.1} parent=1 // pred_check
      _
    $region23: #{tpu_custom_call.1} parent=1 // pred_check_branch
      %63 = sbr.rel (0) target = $region25
    $region24: #{tpu_custom_call.1} parent=1 // pred_region
      %64 = dma.done [#allocation4], 512
    $region25: #{tpu_custom_call.1} parent=1 // pred_fallthru
      _
    %65 = vsyncpa [#allocation3], 1
    %66 = vsyncpa [#allocation6], 1
    %67 = vsyncpa [#allocation4], 1

</llo_original>
